<compile_context>
chip_gen: v5e
topology: v5e:2x2
jax: 0.10.0
libtpu: 0.0.40
codegen_flags: <defaults>
</compile_context>

<pallas_src>
import functools

import jax
import jax.numpy as jnp
from jax.experimental import pallas as pl
from jax.experimental.pallas import tpu as pltpu

EPS = 1e-6


def _partials_kernel(total_b, tile_b, a_ref, p_ref, n_ref, pos_ref, neg_ref):
    a = a_ref[...]
    p = p_ref[...]
    n = n_ref[...]

    if total_b % tile_b != 0:
        # Last tile is partial: zero out padded rows. Their cosine contribution
        # becomes 0 (numerator 0, denominator clamped to eps*eps).
        row = pl.program_id(0) * tile_b + jax.lax.broadcasted_iota(
            jnp.int32, a.shape, 0)
        valid = row < total_b
        a = jnp.where(valid, a, 0)
        p = jnp.where(valid, p, 0)
        n = jnp.where(valid, n, 0)

    # Cast per-tile (inputs travel over DMA in their storage dtype, e.g. bf16).
    a = a.astype(jnp.float32)
    p = p.astype(jnp.float32)
    n = n.astype(jnp.float32)

    # Per-row L2 norms, each clamped to eps (PyTorch CosineSimilarity semantics).
    a_norm = jnp.maximum(jnp.sqrt(jnp.sum(a * a, axis=-1, keepdims=True)), EPS)
    p_norm = jnp.maximum(jnp.sqrt(jnp.sum(p * p, axis=-1, keepdims=True)), EPS)
    n_norm = jnp.maximum(jnp.sqrt(jnp.sum(n * n, axis=-1, keepdims=True)), EPS)

    cos_pos = jnp.sum(a * p, axis=-1, keepdims=True) / (a_norm * p_norm)
    cos_neg = jnp.sum(a * n, axis=-1, keepdims=True) / (a_norm * n_norm)

    # Per-tile partial sums, broadcast into a lane-dense (1, 8, 128) block
    # (unmasked full-lane stores; only element [0, 0] is consumed by the wrapper).
    pos_ref[...] = jnp.full(pos_ref.shape, jnp.sum(cos_pos), dtype=jnp.float32)
    neg_ref[...] = jnp.full(neg_ref.shape, jnp.sum(cos_neg), dtype=jnp.float32)


def _vmem_capacity_bytes():
    try:
        info = pltpu.get_tpu_info()
        cap = getattr(info, "vmem_capacity_bytes", None)
        if cap:
            return int(cap)
    except Exception:
        pass
    return 64 << 20  # conservative default (v7x per-TensorCore VMEM)


def _pick_tile_rows(b, d, itemsize, vmem_limit_bytes):
    budget = int(vmem_limit_bytes * 0.7)
    # 3 inputs x 2 pipeline buffers (storage dtype) + ~6 f32 temporaries per row.
    bytes_per_row = d * (6 * itemsize + 6 * 4)
    tile = budget // max(bytes_per_row, 1)
    tile = max(8, min(tile, 8192))
    if tile >= b:
        return b
    return max(8, (tile // 8) * 8)


def triplet_loss(anchor, positive, negative, margin=1.0, tile_rows=None):
    """Pallas TPU implementation of TripletLoss.forward. Returns a scalar f32."""
    assert anchor.shape == positive.shape == negative.shape
    d = anchor.shape[-1]
    a2 = anchor.reshape(-1, d)
    p2 = positive.reshape(-1, d)
    n2 = negative.reshape(-1, d)
    b = a2.shape[0]
    itemsize = jnp.dtype(a2.dtype).itemsize

    # Generation-aware tiling: half the physical VMEM as the scoped limit
    # (32 MiB on v7x, 64 MiB on v5e/v6e), then size TILE_B under that.
    vmem_cap = _vmem_capacity_bytes()
    vmem_limit = int(min(vmem_cap // 2, 64 << 20))
    if tile_rows is None:
        tile_b = _pick_tile_rows(b, d, itemsize, vmem_limit)
    else:
        tile_b = min(int(tile_rows), b)
    num_tiles = pl.cdiv(b, tile_b)

    kernel = functools.partial(_partials_kernel, b, tile_b)

    in_spec = pl.BlockSpec((tile_b, d), lambda i: (i, 0))
    out_spec = pl.BlockSpec((1, 8, 128), lambda i: (i, 0, 0))
    out_shape = jax.ShapeDtypeStruct((num_tiles, 8, 128), jnp.float32)

    flops = 8 * b * d  # 3 dot-like reductions + divides/compares, approximate
    bytes_accessed = 3 * b * d * itemsize + 2 * num_tiles * 8 * 128 * 4

    pos_part, neg_part = pl.pallas_call(
        kernel,
        grid=(num_tiles,),
        in_specs=[in_spec, in_spec, in_spec],
        out_specs=[out_spec, out_spec],
        out_shape=[out_shape, out_shape],
        compiler_params=pltpu.CompilerParams(
            dimension_semantics=("parallel",),
            vmem_limit_bytes=vmem_limit,
        ),
        cost_estimate=pl.CostEstimate(
            flops=flops, transcendentals=0, bytes_accessed=bytes_accessed),
    )(a2, p2, n2)

    # Tiny finalize in JAX: mean over the true batch, margin, relu.
    mean_pos = jnp.sum(pos_part[:, 0, 0]) / b
    mean_neg = jnp.sum(neg_part[:, 0, 0]) / b
    return jnp.maximum(-mean_pos + mean_neg + jnp.float32(margin), 0.0)


def _reference(anchor, positive, negative, margin=1.0):
    a = anchor.astype(jnp.float32)
    p = positive.astype(jnp.float32)
    n = negative.astype(jnp.float32)

    def cos(x1, x2):
        n1 = jnp.maximum(jnp.linalg.norm(x1, axis=-1), EPS)
        n2 = jnp.maximum(jnp.linalg.norm(x2, axis=-1), EPS)
        return jnp.sum(x1 * x2, axis=-1) / (n1 * n2)

    dp = cos(a, p)
    dn = cos(a, n)
    return jnp.maximum(-jnp.mean(dp) + jnp.mean(dn) + margin, 0.0)


if __name__ == "__main__":
    key = jax.random.PRNGKey(0)

    # Case 1: small f32 embeddings, single tile.
    k_a, k_p, k_n, k2 = jax.random.split(key, 4)
    B, D = 8, 32
    anchor = jax.random.normal(k_a, (B, D), dtype=jnp.float32)
    positive = jax.random.normal(k_p, (B, D), dtype=jnp.float32)
    negative = jax.random.normal(k_n, (B, D), dtype=jnp.float32)

    loss = triplet_loss(anchor, positive, negative, margin=1.0)
    jax.block_until_ready(loss)
    ref = _reference(anchor, positive, negative, margin=1.0)
    assert jnp.allclose(loss, ref, atol=1e-5, rtol=1e-5), (loss, ref)

    # Case 2: bf16 inputs, forced small tile -> multi-tile grid with a partial
    # last tile (exercises masking + partial-sum reduction + parallel axis).
    k_a2, k_p2, k_n2 = jax.random.split(k2, 3)
    B2, D2 = 20, 128
    anchor2 = jax.random.normal(k_a2, (B2, D2), dtype=jnp.float32).astype(jnp.bfloat16)
    positive2 = jax.random.normal(k_p2, (B2, D2), dtype=jnp.float32).astype(jnp.bfloat16)
    negative2 = jax.random.normal(k_n2, (B2, D2), dtype=jnp.float32).astype(jnp.bfloat16)

    loss2 = triplet_loss(anchor2, positive2, negative2, margin=0.25, tile_rows=8)
    jax.block_until_ready(loss2)
    ref2 = _reference(anchor2, positive2, negative2, margin=0.25)
    assert jnp.allclose(loss2, ref2, atol=1e-4, rtol=1e-4), (loss2, ref2)

    print("KERNEL_OK")
</pallas_src>

<mosaic_0001>
module attributes {stable_mosaic.version = 11 : i64} {
  func.func @_partials_kernel(%arg0: i32, %arg1: memref<8x32xf32, #tpu.memory_space<vmem>>, %arg2: memref<8x32xf32, #tpu.memory_space<vmem>>, %arg3: memref<8x32xf32, #tpu.memory_space<vmem>>, %arg4: memref<1x8x128xf32, #tpu.memory_space<vmem>>, %arg5: memref<1x8x128xf32, #tpu.memory_space<vmem>>) attributes {dimension_semantics = [#tpu.dimension_semantics<parallel>], iteration_bounds = array<i64: 1>, scalar_prefetch = 0 : i64, scratch_operands = 0 : i64, tpu.core_type = #tpu.core_type<tc>, window_params = [{transform_indices = @transform_0, window_bounds = array<i64: 8, 32>}, {transform_indices = @transform_1, window_bounds = array<i64: 8, 32>}, {transform_indices = @transform_2, window_bounds = array<i64: 8, 32>}, {transform_indices = @transform_3, window_bounds = array<i64: 1, 8, 128>}, {transform_indices = @transform_4, window_bounds = array<i64: 1, 8, 128>}]} {
    %c0 = arith.constant 0 : index
    %c0_0 = arith.constant 0 : index
    %0 = vector.load %arg1[%c0, %c0_0] : memref<8x32xf32, #tpu.memory_space<vmem>>, vector<8x32xf32>
    %c0_1 = arith.constant 0 : index
    %c0_2 = arith.constant 0 : index
    %1 = vector.load %arg2[%c0_1, %c0_2] : memref<8x32xf32, #tpu.memory_space<vmem>>, vector<8x32xf32>
    %c0_3 = arith.constant 0 : index
    %c0_4 = arith.constant 0 : index
    %2 = vector.load %arg3[%c0_3, %c0_4] : memref<8x32xf32, #tpu.memory_space<vmem>>, vector<8x32xf32>
    %3 = arith.mulf %0, %0 : vector<8x32xf32>
    %cst = arith.constant dense<0.000000e+00> : vector<8xf32>
    %4 = vector.multi_reduction <add>, %3, %cst [1] : vector<8x32xf32> to vector<8xf32>
    %5 = vector.shape_cast %4 : vector<8xf32> to vector<8x1xf32>
    %6 = math.sqrt %5 : vector<8x1xf32>
    %cst_5 = arith.constant 9.99999997E-7 : f32
    %7 = vector.broadcast %cst_5 : f32 to vector<8x1xf32>
    %8 = arith.maximumf %6, %7 : vector<8x1xf32>
    %9 = arith.mulf %1, %1 : vector<8x32xf32>
    %cst_6 = arith.constant dense<0.000000e+00> : vector<8xf32>
    %10 = vector.multi_reduction <add>, %9, %cst_6 [1] : vector<8x32xf32> to vector<8xf32>
    %11 = vector.shape_cast %10 : vector<8xf32> to vector<8x1xf32>
    %12 = math.sqrt %11 : vector<8x1xf32>
    %cst_7 = arith.constant 9.99999997E-7 : f32
    %13 = vector.broadcast %cst_7 : f32 to vector<8x1xf32>
    %14 = arith.maximumf %12, %13 : vector<8x1xf32>
    %15 = arith.mulf %2, %2 : vector<8x32xf32>
    %cst_8 = arith.constant dense<0.000000e+00> : vector<8xf32>
    %16 = vector.multi_reduction <add>, %15, %cst_8 [1] : vector<8x32xf32> to vector<8xf32>
    %17 = vector.shape_cast %16 : vector<8xf32> to vector<8x1xf32>
    %18 = math.sqrt %17 : vector<8x1xf32>
    %cst_9 = arith.constant 9.99999997E-7 : f32
    %19 = vector.broadcast %cst_9 : f32 to vector<8x1xf32>
    %20 = arith.maximumf %18, %19 : vector<8x1xf32>
    %21 = arith.mulf %0, %1 : vector<8x32xf32>
    %cst_10 = arith.constant dense<0.000000e+00> : vector<8xf32>
    %22 = vector.multi_reduction <add>, %21, %cst_10 [1] : vector<8x32xf32> to vector<8xf32>
    %23 = vector.shape_cast %22 : vector<8xf32> to vector<8x1xf32>
    %24 = arith.mulf %8, %14 : vector<8x1xf32>
    %25 = arith.divf %23, %24 : vector<8x1xf32>
    %26 = arith.mulf %0, %2 : vector<8x32xf32>
    %cst_11 = arith.constant dense<0.000000e+00> : vector<8xf32>
    %27 = vector.multi_reduction <add>, %26, %cst_11 [1] : vector<8x32xf32> to vector<8xf32>
    %28 = vector.shape_cast %27 : vector<8xf32> to vector<8x1xf32>
    %29 = arith.mulf %8, %20 : vector<8x1xf32>
    %30 = arith.divf %28, %29 : vector<8x1xf32>
    %31 = vector.shape_cast %25 : vector<8x1xf32> to vector<1x8x1xf32>
    %cst_12 = arith.constant dense<0.000000e+00> : vector<1xf32>
    %32 = vector.multi_reduction <add>, %31, %cst_12 [1, 2] : vector<1x8x1xf32> to vector<1xf32>
    %33 = vector.shape_cast %32 : vector<1xf32> to vector<1x1x1xf32>
    %34 = vector.extract %33[0, 0, 0] : f32 from vector<1x1x1xf32>
    %35 = vector.broadcast %34 : f32 to vector<1x8x128xf32>
    %c0_13 = arith.constant 0 : index
    %c0_14 = arith.constant 0 : index
    %c0_15 = arith.constant 0 : index
    %36 = vector.load %arg4[%c0_13, %c0_14, %c0_15] : memref<1x8x128xf32, #tpu.memory_space<vmem>>, vector<1x8x128xf32>
    tpu.vector_store %arg4[%c0_13, %c0_14, %c0_15], %35 {strides = array<i32>} : memref<1x8x128xf32, #tpu.memory_space<vmem>>, vector<1x8x128xf32>,
    %37 = vector.shape_cast %30 : vector<8x1xf32> to vector<1x8x1xf32>
    %cst_16 = arith.constant dense<0.000000e+00> : vector<1xf32>
    %38 = vector.multi_reduction <add>, %37, %cst_16 [1, 2] : vector<1x8x1xf32> to vector<1xf32>
    %39 = vector.shape_cast %38 : vector<1xf32> to vector<1x1x1xf32>
    %40 = vector.extract %39[0, 0, 0] : f32 from vector<1x1x1xf32>
    %41 = vector.broadcast %40 : f32 to vector<1x8x128xf32>
    %c0_17 = arith.constant 0 : index
    %c0_18 = arith.constant 0 : index
    %c0_19 = arith.constant 0 : index
    %42 = vector.load %arg5[%c0_17, %c0_18, %c0_19] : memref<1x8x128xf32, #tpu.memory_space<vmem>>, vector<1x8x128xf32>
    tpu.vector_store %arg5[%c0_17, %c0_18, %c0_19], %41 {strides = array<i32>} : memref<1x8x128xf32, #tpu.memory_space<vmem>>, vector<1x8x128xf32>,
    return
  }
  func.func @transform_0(%arg0: i32) -> (i32, i32) {
    %c0_i32 = arith.constant 0 : i32
    %c0_i32_0 = arith.constant 0 : i32
    return %arg0, %c0_i32 : i32, i32
  }
  func.func @transform_1(%arg0: i32) -> (i32, i32) {
    %c0_i32 = arith.constant 0 : i32
    %c0_i32_0 = arith.constant 0 : i32
    return %arg0, %c0_i32 : i32, i32
  }
  func.func @transform_2(%arg0: i32) -> (i32, i32) {
    %c0_i32 = arith.constant 0 : i32
    %c0_i32_0 = arith.constant 0 : i32
    return %arg0, %c0_i32 : i32, i32
  }
  func.func @transform_3(%arg0: i32) -> (i32, i32, i32) {
    %c0_i32 = arith.constant 0 : i32
    %c0_i32_0 = arith.constant 0 : i32
    %c0_i32_1 = arith.constant 0 : i32
    return %arg0, %c0_i32, %c0_i32_0 : i32, i32, i32
  }
  func.func @transform_4(%arg0: i32) -> (i32, i32, i32) {
    %c0_i32 = arith.constant 0 : i32
    %c0_i32_0 = arith.constant 0 : i32
    %c0_i32_1 = arith.constant 0 : i32
    return %arg0, %c0_i32, %c0_i32_0 : i32, i32, i32
  }
}

</mosaic_0001>

<llo_original>
// kernel: tpu_custom_call.1
$region0: #{tpu_custom_call.1}
  #allocation0 [shape = 'u32[]', space=smem, size = 0x4, offset = 0x4, fixed_abs, tag = 'smem constant byte address 0x4 - core index']
  #allocation1 [shape = 'u32[72,128]{1,0:T(1,128)}', space=vmem, size = 0x9000, scoped, tag = 'internal scratch']
  %s0 = inlined_call_operand.hbm [shape: f32[8,32], index: 0, kind: input, shape index: {}]
  %s1 = inlined_call_operand.hbm [shape: f32[8,32], index: 1, kind: input, shape index: {}]
  %s2 = inlined_call_operand.hbm [shape: f32[8,32], index: 2, kind: input, shape index: {}]
  %s3 = inlined_call_operand.hbm [shape: f32[1,8,128], index: 3, kind: output, shape index: {0}]
  %s4 = inlined_call_operand.hbm [shape: f32[1,8,128], index: 4, kind: output, shape index: {1}]
  %5 = xla_tuple %s3, %s4
  %s6 = sld [smem:[#allocation0]]
  $region42: #{tpu_custom_call.1} parent=0
    _
  %s8 = ssub.s32 1, %s6
  %s9 = scalar_select 0, %s8, %s6
  $region1: #{tpu_custom_call.1} parent=0
    #allocation2 [shape = 'u8[4096]{0}', space=vmem, size = 0x1000, scoped, tag = 'input window, operand 0, single buffered']
    #allocation3 [shape = 's32[1]{0}', space=sflag, size = 0x4, scoped, tag = 'scoped memory for tpu_custom_call.1']
    #allocation4 [shape = 's32[1]{0}', space=sflag, size = 0x4, scoped, tag = 'scoped memory for tpu_custom_call.1']
    #allocation5 [shape = 'u8[4096]{0}', space=vmem, size = 0x1000, scoped, tag = 'input window, operand 1, single buffered']
    #allocation6 [shape = 's32[1]{0}', space=sflag, size = 0x4, scoped, tag = 'scoped memory for tpu_custom_call.1']
    #allocation7 [shape = 'u8[4096]{0}', space=vmem, size = 0x1000, scoped, tag = 'input window, operand 2, single buffered']
    #allocation8 [shape = 'u8[4096]{0}', space=vmem, size = 0x1000, scoped, tag = 'output window, operand 0, single buffered']
    #allocation9 [shape = 'u8[4096]{0}', space=vmem, size = 0x1000, scoped, tag = 'output window, operand 1, single buffered']
    #allocation10 [shape = 's32[1]{0}', space=sflag, size = 0x4, scoped, tag = 'scoped memory for tpu_custom_call.1']
    %10 = vsyncpa [#allocation3], 0
    %11 = vsyncpa [#allocation6], 0
    %12 = vsyncpa [#allocation4], 0
    %13 = vsyncpa [#allocation10], 0
    // Predicated region
    $region2: #{tpu_custom_call.1} parent=1 // pred_check
      _
    $region3: #{tpu_custom_call.1} parent=1 // pred_check_branch
      %15 = sbr.rel (0) target = $region5
    $region4: #{tpu_custom_call.1} parent=1 // pred_region
      %17 = vsyncadd [#allocation3], 0
      %s19 = sshll.u32 %s0, 4
      %s20 = int_to_ptr.hbm [resolvable:$true] %s19
      %s21 = sshll.u32 [#allocation2], 4
      %s22 = int_to_ptr.vmem [resolvable:$true] %s21
      %24 = dma.hbm_to_vmem [thread:$0]  %s20, 128, %s22, [#allocation3]
    $region5: #{tpu_custom_call.1} parent=1 // pred_fallthru
      _
    // Predicated region
    $region6: #{tpu_custom_call.1} parent=1 // pred_check
      _
    $region7: #{tpu_custom_call.1} parent=1 // pred_check_branch
      %26 = sbr.rel (0) target = $region9
    $region8: #{tpu_custom_call.1} parent=1 // pred_region
      %28 = vsyncadd [#allocation6], 0
      %s30 = sshll.u32 %s1, 4
      %s31 = int_to_ptr.hbm [resolvable:$true] %s30
      %s32 = sshll.u32 [#allocation5], 4
      %s33 = int_to_ptr.vmem [resolvable:$true] %s32
      %35 = dma.hbm_to_vmem [thread:$0]  %s31, 128, %s33, [#allocation6]
    $region9: #{tpu_custom_call.1} parent=1 // pred_fallthru
      _
    // Predicated region
    $region10: #{tpu_custom_call.1} parent=1 // pred_check
      _
    $region11: #{tpu_custom_call.1} parent=1 // pred_check_branch
      %37 = sbr.rel (0) target = $region13
    $region12: #{tpu_custom_call.1} parent=1 // pred_region
      %39 = vsyncadd [#allocation6], 0
      %s41 = sshll.u32 %s2, 4
      %s42 = int_to_ptr.hbm [resolvable:$true] %s41
      %s43 = sshll.u32 [#allocation7], 4
      %s44 = int_to_ptr.vmem [resolvable:$true] %s43
      %46 = dma.hbm_to_vmem [thread:$0]  %s42, 128, %s44, [#allocation6]
    $region13: #{tpu_custom_call.1} parent=1 // pred_fallthru
      _
    // Predicated region
    $region14: #{tpu_custom_call.1} parent=1 // pred_check
      _
    $region15: #{tpu_custom_call.1} parent=1 // pred_check_branch
      %48 = sbr.rel (0) target = $region17
    $region16: #{tpu_custom_call.1} parent=1 // pred_region
      %50 = dma.done [#allocation3], 128
    $region17: #{tpu_custom_call.1} parent=1 // pred_fallthru
      _
    // Predicated region
    $region18: #{tpu_custom_call.1} parent=1 // pred_check
      _
    $region19: #{tpu_custom_call.1} parent=1 // pred_check_branch
      %52 = sbr.rel (0) target = $region21
    $region20: #{tpu_custom_call.1} parent=1 // pred_region
      %54 = dma.done [#allocation6], 128
    $region21: #{tpu_custom_call.1} parent=1 // pred_fallthru
      _
    // Predicated region
    $region22: #{tpu_custom_call.1} parent=1 // pred_check
      _
    $region23: #{tpu_custom_call.1} parent=1 // pred_check_branch
      %56 = sbr.rel (0) target = $region25
    $region24: #{tpu_custom_call.1} parent=1 // pred_region
      %58 = dma.done [#allocation6], 128
    $region25: #{tpu_custom_call.1} parent=1 // pred_fallthru
      _
    %v59 = vld [vmem:[#allocation2] sm:$0xff]
    %v60 = vld [vmem:[#allocation5] sm:$0xff]
    %v61 = vld [vmem:[#allocation7] sm:$0xff]
    %v62 = vmul.f32 %v59, %v59
    %vm63 = vcmask 261120
    %v64 = vsel %vm63, %v62, 0.0
    %65 = vadd.xlane.f32.xlu0 %v64
    %v66 = vpop.xlane.xlu0 %65
    %v67 = vrsqrt.pop %v66
    %v68 = vmul.f32 %v67, %v66
    %v69 = vmul.f32 %v68, %v67
    %v70 = vmul.f32 0.5, %v69
    %v71 = vsub.f32 1.5, %v70
    %v72 = vmul.f32 %v67, %v71
    %v73 = vmul.f32 %v66, %v72
    %vm74 = vcmp.eq.f32.partialorder %v66, inf
    %v75 = vsel %vm74, %v66, %v73
    %vm76 = vcmp.eq.f32.partialorder %v66, 0.0
    %v77 = vand.u32 %v66, 2147483648
    %v78 = vsel %vm76, %v77, %v75
    %v79 = vmax.f32 %v78, 1e-06
    %v80 = vmul.f32 %v60, %v60
    %v81 = vsel %vm63, %v80, 0.0
    %82 = vadd.xlane.f32.xlu0 %v81
    %v83 = vpop.xlane.xlu0 %82
    %v84 = vrsqrt.pop %v83
    %v85 = vmul.f32 %v84, %v83
    %v86 = vmul.f32 %v85, %v84
    %v87 = vmul.f32 0.5, %v86
    %v88 = vsub.f32 1.5, %v87
    %v89 = vmul.f32 %v84, %v88
    %v90 = vmul.f32 %v83, %v89
    %vm91 = vcmp.eq.f32.partialorder %v83, inf
    %v92 = vsel %vm91, %v83, %v90
    %vm93 = vcmp.eq.f32.partialorder %v83, 0.0
    %v94 = vand.u32 %v83, 2147483648
    %v95 = vsel %vm93, %v94, %v92
    %v96 = vmax.f32 %v95, 1e-06
    %v97 = vmul.f32 %v61, %v61
    %v98 = vsel %vm63, %v97, 0.0
    %99 = vadd.xlane.f32.xlu0 %v98
    %v100 = vpop.xlane.xlu0 %99
    %v101 = vrsqrt.pop %v100
    %v102 = vmul.f32 %v101, %v100
    %v103 = vmul.f32 %v102, %v101
    %v104 = vmul.f32 0.5, %v103
    %v105 = vsub.f32 1.5, %v104
    %v106 = vmul.f32 %v101, %v105
    %v107 = vmul.f32 %v100, %v106
    %vm108 = vcmp.eq.f32.partialorder %v100, inf
    %v109 = vsel %vm108, %v100, %v107
    %vm110 = vcmp.eq.f32.partialorder %v100, 0.0
    %v111 = vand.u32 %v100, 2147483648
    %v112 = vsel %vm110, %v111, %v109
    %v113 = vmax.f32 %v112, 1e-06
    %v114 = vmul.f32 %v59, %v60
    %v115 = vsel %vm63, %v114, 0.0
    %116 = vadd.xlane.f32.xlu0 %v115
    %v117 = vpop.xlane.xlu0 %116
    %v118 = vmul.f32 %v79, %v96
    %v119 = vrcp.pop %v118
    %v120 = vmul.f32 %v118, %v119
    %v121 = vsub.f32 1.0, %v120
    %v122 = vmul.f32 %v119, %v121
    %v123 = vadd.f32 %v119, %v122
    %vm124 = vweird.f32 %v118
    %vm125 = vweird.f32 %v119
    %vm126 = vmor %vm124, %vm125
    %v127 = vsel %vm126, %v119, %v123
    %v128 = vand.u32 2147483647, %v118
    %vm129 = vcmp.eq.f32.partialorder %v128, 8.507059e+37
    %v130 = vand.u32 %v118, 2147483648
    %v131 = vor.u32 1.1754944e-38, %v130
    %v132 = vsel %vm129, %v131, %v127
    %v133 = vmul.f32 %v117, %v132
    %v134 = vmul.f32 %v59, %v61
    %v135 = vsel %vm63, %v134, 0.0
    %136 = vadd.xlane.f32.xlu0 %v135
    %v137 = vpop.xlane.xlu0 %136
    %v138 = vmul.f32 %v79, %v113
    %v139 = vrcp.pop %v138
    %v140 = vmul.f32 %v138, %v139
    %v141 = vsub.f32 1.0, %v140
    %v142 = vmul.f32 %v139, %v141
    %v143 = vadd.f32 %v139, %v142
    %vm144 = vweird.f32 %v138
    %vm145 = vweird.f32 %v139
    %vm146 = vmor %vm144, %vm145
    %v147 = vsel %vm146, %v139, %v143
    %v148 = vand.u32 2147483647, %v138
    %vm149 = vcmp.eq.f32.partialorder %v148, 8.507059e+37
    %v150 = vand.u32 %v138, 2147483648
    %v151 = vor.u32 1.1754944e-38, %v150
    %v152 = vsel %vm149, %v151, %v147
    %v153 = vmul.f32 %v137, %v152
    %vm154 = vcmask 7168
    %v155 = vsel %vm154, %v133, 0.0
    %156 = vadd.xlane.f32.xlu0 %v155
    %v157 = vpop.xlane.xlu0 %156
    %v158 = vrot.slane %v157, 4
    %v159 = vadd.f32 %v157, %v158
    %v160 = vrot.slane %v159, 2
    %v161 = vadd.f32 %v159, %v160
    %v162 = vrot.slane %v161, 1
    %v163 = vadd.f32 %v161, %v162
    %s164 = vtos %v163
    %v165 = vstv %s164
    %166 = vst [vmem:[#allocation8] sm:$0xff] %v165
    %v167 = vsel %vm154, %v153, 0.0
    %168 = vadd.xlane.f32.xlu0 %v167
    %v169 = vpop.xlane.xlu0 %168
    %v170 = vrot.slane %v169, 4
    %v171 = vadd.f32 %v169, %v170
    %v172 = vrot.slane %v171, 2
    %v173 = vadd.f32 %v171, %v172
    %v174 = vrot.slane %v173, 1
    %v175 = vadd.f32 %v173, %v174
    %s176 = vtos %v175
    %v177 = vstv %s176
    %178 = vst [vmem:[#allocation9] sm:$0xff] %v177
    // Predicated region
    $region26: #{tpu_custom_call.1} parent=1 // pred_check
      _
    $region27: #{tpu_custom_call.1} parent=1 // pred_check_branch
      %180 = sbr.rel (0) target = $region29
    $region28: #{tpu_custom_call.1} parent=1 // pred_region
      %182 = vsyncadd [#allocation4], 0
      %s184 = sshll.u32 [#allocation8], 4
      %s185 = int_to_ptr.vmem [resolvable:$true] %s184
      %s186 = sshll.u32 %s3, 4
      %s187 = int_to_ptr.hbm [resolvable:$true] %s186
      %189 = dma.vmem_to_hbm [thread:$0]  %s185, 128, %s187, [#allocation4]
    $region29: #{tpu_custom_call.1} parent=1 // pred_fallthru
      _
    // Predicated region
    $region30: #{tpu_custom_call.1} parent=1 // pred_check
      _
    $region31: #{tpu_custom_call.1} parent=1 // pred_check_branch
      %191 = sbr.rel (0) target = $region33
    $region32: #{tpu_custom_call.1} parent=1 // pred_region
      %193 = vsyncadd [#allocation10], 0
      %s195 = sshll.u32 [#allocation9], 4
      %s196 = int_to_ptr.vmem [resolvable:$true] %s195
      %s197 = sshll.u32 %s4, 4
      %s198 = int_to_ptr.hbm [resolvable:$true] %s197
      %200 = dma.vmem_to_hbm [thread:$0]  %s196, 128, %s198, [#allocation10]
    $region33: #{tpu_custom_call.1} parent=1 // pred_fallthru
      _
    // Predicated region
    $region34: #{tpu_custom_call.1} parent=1 // pred_check
      _
    $region35: #{tpu_custom_call.1} parent=1 // pred_check_branch
      %202 = sbr.rel (0) target = $region37
    $region36: #{tpu_custom_call.1} parent=1 // pred_region
      %204 = dma.done [#allocation4], 128
    $region37: #{tpu_custom_call.1} parent=1 // pred_fallthru
      _
    // Predicated region
    $region38: #{tpu_custom_call.1} parent=1 // pred_check
      _
    $region39: #{tpu_custom_call.1} parent=1 // pred_check_branch
      %206 = sbr.rel (0) target = $region41
    $region40: #{tpu_custom_call.1} parent=1 // pred_region
      %208 = dma.done [#allocation10], 128
    $region41: #{tpu_custom_call.1} parent=1 // pred_fallthru
      _
    %209 = vsyncpa [#allocation3], 1
    %210 = vsyncpa [#allocation6], 1
    %211 = vsyncpa [#allocation4], 1
    %212 = vsyncpa [#allocation10], 1

</llo_original>
